<compile_context>
chip_gen: v5e
topology: v5e:2x2
jax: 0.10.0
libtpu: 0.0.40
codegen_flags: <defaults>
</compile_context>

<pallas_src>
import jax
import jax.numpy as jnp
from jax import lax
from jax.experimental import pallas as pl
from jax.experimental.pallas import tpu as pltpu

EPS = 1e-05
LANE = 128
ROW_TILE = 512          # rows (output voxels) per grid step; fixed -> bounded VMEM


def _round_up(x, m):
    return (x + m - 1) // m * m


# ---------- Pass 1: conv (single MXU matmul) + ReLU + partial BN statistics ----------
def _conv_relu_stats_kernel(p_ref, w_ref, y_ref, s_ref):
    # p_ref : (tm, KCp)       bf16  im2col patches (taps folded into contraction)
    # w_ref : (KCp, Co_pad)   bf16  folded forward-conv weight
    # y_ref : (tm, Co_pad)    f32   conv + ReLU activations (pre-BN)
    # s_ref : (1, 2, Co_pad)  f32   per-tile [sum, sum_of_squares] over rows
    y = jnp.dot(p_ref[...], w_ref[...], preferred_element_type=jnp.float32)
    y = jnp.maximum(y, 0.0)                              # ReLU
    y_ref[...] = y
    ssum = jnp.sum(y, axis=0, keepdims=True)             # (1, Co_pad)
    ssq = jnp.sum(y * y, axis=0, keepdims=True)          # (1, Co_pad)
    s_ref[...] = jnp.concatenate([ssum, ssq], axis=0)[None]


# ---------- Pass 2: BatchNorm apply (y * scale + shift), lane-dense elementwise ------
def _bn_apply_kernel(y_ref, scale_ref, shift_ref, o_ref):
    # scale/shift are precomputed per-channel vectors (hoisted out of the kernel).
    o_ref[...] = y_ref[...] * scale_ref[...] + shift_ref[...]


def tconv3_forward(x_ncdhw, w_t, gamma, beta, *, k=3, s=1, p=1, op=0,
                   compute_dtype=jnp.bfloat16, row_tile=ROW_TILE):
    """TConv3 forward. x_ncdhw: (N, Ci, D, H, W); w_t: ConvTranspose3d weight (Ci, Co, k, k, k)."""
    # TODO(synk): stride > 1 ConvTranspose needs input dilation; not implemented here.
    assert s == 1, "only stride=1 is supported"
    N, Ci, D, H, W = x_ncdhw.shape
    Co = w_t.shape[1]

    pad_lo = k - 1 - p
    pad_hi = k - 1 - p + op
    Do = (D - 1) * s - 2 * p + k + op
    Ho = (H - 1) * s - 2 * p + k + op
    Wo = (W - 1) * s - 2 * p + k + op

    KC = k * k * k * Ci
    KCp = _round_up(KC, LANE)                 # contraction dim, padded lane-dense
    Co_pad = _round_up(Co, LANE)              # output channels, padded lane-dense
    rows = N * Do * Ho * Wo
    tm = row_tile
    rows_pad = _round_up(rows, tm)
    G = rows_pad // tm

    # --- Weight: ConvTranspose3d(s=1) == forward conv with flipped kernel, swapped io.
    w_conv = jnp.flip(w_t, axis=(2, 3, 4)).transpose(2, 3, 4, 0, 1)   # (kd,kh,kw,Ci,Co)
    w_conv = w_conv.reshape(KC, Co).astype(jnp.float32)
    w_conv = jnp.pad(w_conv, ((0, KCp - KC), (0, Co_pad - Co))).astype(compute_dtype)

    # --- Input: NCDHW -> NDHWC, spatial zero-pad, im2col (XLA gather, done once).
    x_ndhwc = jnp.transpose(x_ncdhw, (0, 2, 3, 4, 1)).astype(jnp.float32)
    x_sp = jnp.pad(x_ndhwc, ((0, 0),
                             (pad_lo, pad_hi), (pad_lo, pad_hi), (pad_lo, pad_hi),
                             (0, 0)))
    d_idx = jnp.arange(Do)[:, None] + jnp.arange(k)[None, :]
    h_idx = jnp.arange(Ho)[:, None] + jnp.arange(k)[None, :]
    w_idx = jnp.arange(Wo)[:, None] + jnp.arange(k)[None, :]
    pt = x_sp[:, d_idx]                                   # (N, Do, k, Hp, Wp, Ci)
    pt = pt[:, :, :, h_idx]                               # (N, Do, k, Ho, k, Wp, Ci)
    pt = pt[:, :, :, :, :, w_idx]                         # (N, Do, k, Ho, k, Wo, k, Ci)
    pt = jnp.transpose(pt, (0, 1, 3, 5, 2, 4, 6, 7))      # (N, Do, Ho, Wo, kd, kh, kw, Ci)
    patches = pt.reshape(rows, KC)
    patches = jnp.pad(patches,
                      ((0, rows_pad - rows), (0, KCp - KC))).astype(compute_dtype)

    cparams = pltpu.CompilerParams(dimension_semantics=("parallel",),
                                   vmem_limit_bytes=32 * 1024 * 1024)

    # --- Pass 1: tiled conv + ReLU + partial batch statistics.
    y_pre, part_stats = pl.pallas_call(
        _conv_relu_stats_kernel,
        grid=(G,),
        in_specs=[
            pl.BlockSpec((tm, KCp), lambda i: (i, 0)),
            pl.BlockSpec((KCp, Co_pad), lambda i: (0, 0)),
        ],
        out_specs=(
            pl.BlockSpec((tm, Co_pad), lambda i: (i, 0)),
            pl.BlockSpec((1, 2, Co_pad), lambda i: (i, 0, 0)),
        ),
        out_shape=(
            jax.ShapeDtypeStruct((rows_pad, Co_pad), jnp.float32),
            jax.ShapeDtypeStruct((G, 2, Co_pad), jnp.float32),
        ),
        compiler_params=cparams,
    )(patches, w_conv)

    # --- Finalize BatchNorm stats (tiny per-channel work; zero-padded rows add 0).
    stats = jnp.sum(part_stats, axis=0)                    # (2, Co_pad)
    cnt = jnp.float32(rows)                                # true N*Do*Ho*Wo count
    mean = stats[0] / cnt
    var = jnp.maximum(stats[1] / cnt - mean * mean, 0.0)   # biased batch variance
    g_pad = jnp.pad(gamma.astype(jnp.float32), (0, Co_pad - Co), constant_values=1.0)
    b_pad = jnp.pad(beta.astype(jnp.float32), (0, Co_pad - Co))
    inv = lax.rsqrt(var + EPS)
    scale = (g_pad * inv).reshape(1, Co_pad)
    shift = (b_pad - mean * g_pad * inv).reshape(1, Co_pad)

    # --- Pass 2: tiled, lane-dense BN apply. Dropout3d(p=0.0) is the identity.
    out_flat = pl.pallas_call(
        _bn_apply_kernel,
        grid=(G,),
        in_specs=[
            pl.BlockSpec((tm, Co_pad), lambda i: (i, 0)),
            pl.BlockSpec((1, Co_pad), lambda i: (0, 0)),
            pl.BlockSpec((1, Co_pad), lambda i: (0, 0)),
        ],
        out_specs=pl.BlockSpec((tm, Co_pad), lambda i: (i, 0)),
        out_shape=jax.ShapeDtypeStruct((rows_pad, Co_pad), jnp.float32),
        compiler_params=cparams,
    )(y_pre, scale, shift)

    out = out_flat[:rows, :Co].reshape(N, Do, Ho, Wo, Co)
    return jnp.transpose(out, (0, 4, 1, 2, 3))             # back to NCDHW


def _reference(x, w_t, gamma, beta, *, k=3, p=1, op=0):
    """Pure-XLA f32 reference for validation."""
    w_oidhw = jnp.flip(w_t, axis=(2, 3, 4)).transpose(1, 0, 2, 3, 4)   # (Co, Ci, kd, kh, kw)
    y = lax.conv_general_dilated(
        x, w_oidhw, window_strides=(1, 1, 1),
        padding=[(k - 1 - p, k - 1 - p + op)] * 3,
        dimension_numbers=("NCDHW", "OIDHW", "NCDHW"))
    y = jnp.maximum(y, 0.0)
    mean = jnp.mean(y, axis=(0, 2, 3, 4), keepdims=True)
    var = jnp.mean((y - mean) ** 2, axis=(0, 2, 3, 4), keepdims=True)
    g = gamma.reshape(1, -1, 1, 1, 1)
    b = beta.reshape(1, -1, 1, 1, 1)
    return (y - mean) * lax.rsqrt(var + EPS) * g + b


if __name__ == "__main__":
    key = jax.random.PRNGKey(0)
    kx, kw = jax.random.split(key)

    N, Ci, D, H, W = 2, 4, 8, 8, 8
    Co, K = 8, 3

    x = jax.random.normal(kx, (N, Ci, D, H, W), dtype=jnp.float32)
    # ConvTranspose3d weight shape: (C_in, C_out, k, k, k); bias=False.
    w_t = 0.1 * jax.random.normal(kw, (Ci, Co, K, K, K), dtype=jnp.float32)
    # BatchNorm3d default affine init.
    gamma = jnp.ones((Co,), jnp.float32)
    beta = jnp.zeros((Co,), jnp.float32)

    out = jax.block_until_ready(
        tconv3_forward(x, w_t, gamma, beta, k=K, s=1, p=1, op=0))

    # Compare against a reference fed the same bf16-quantised operands, so the check
    # isolates kernel correctness from the intentional bf16 MXU cast.
    x_q = x.astype(jnp.bfloat16).astype(jnp.float32)
    w_q = w_t.astype(jnp.bfloat16).astype(jnp.float32)
    ref = jax.block_until_ready(_reference(x_q, w_q, gamma, beta, k=K, p=1, op=0))

    assert out.shape == (N, Co, D, H, W), out.shape
    max_err = float(jnp.max(jnp.abs(out - ref)))
    assert max_err < 1e-3, max_err
    print("KERNEL_OK")
</pallas_src>

<mosaic_0001>
module attributes {stable_mosaic.version = 11 : i64} {
  func.func @_conv_relu_stats_kernel(%arg0: i32, %arg1: memref<512x128xbf16, #tpu.memory_space<vmem>>, %arg2: memref<128x128xbf16, #tpu.memory_space<vmem>>, %arg3: memref<512x128xf32, #tpu.memory_space<vmem>>, %arg4: memref<1x2x128xf32, #tpu.memory_space<vmem>>) attributes {dimension_semantics = [#tpu.dimension_semantics<parallel>], iteration_bounds = array<i64: 2>, scalar_prefetch = 0 : i64, scratch_operands = 0 : i64, tpu.core_type = #tpu.core_type<tc>, window_params = [{transform_indices = @transform_0, window_bounds = array<i64: 512, 128>}, {pipeline_mode = #tpu.pipeline_mode<synchronous>, transform_indices = @transform_1, window_bounds = array<i64: 128, 128>}, {transform_indices = @transform_2, window_bounds = array<i64: 512, 128>}, {transform_indices = @transform_3, window_bounds = array<i64: 1, 2, 128>}]} {
    %c0 = arith.constant 0 : index
    %c0_0 = arith.constant 0 : index
    %0 = vector.load %arg1[%c0, %c0_0] : memref<512x128xbf16, #tpu.memory_space<vmem>>, vector<512x128xbf16>
    %c0_1 = arith.constant 0 : index
    %c0_2 = arith.constant 0 : index
    %1 = vector.load %arg2[%c0_1, %c0_2] : memref<128x128xbf16, #tpu.memory_space<vmem>>, vector<128x128xbf16>
    %cst = arith.constant dense<0.000000e+00> : vector<512x128xf32>
    %2 = tpu.matmul %0, %1, %cst {dimension_numbers = #tpu.dot_dimension_numbers<[1], [0], [0], [1], [0, 0, 1, 1], [], []>} : vector<512x128xbf16>, vector<128x128xbf16>, vector<512x128xf32> -> vector<512x128xf32>
    %cst_3 = arith.constant 0.000000e+00 : f32
    %3 = vector.broadcast %cst_3 : f32 to vector<512x128xf32>
    %4 = arith.maximumf %2, %3 : vector<512x128xf32>
    %c0_4 = arith.constant 0 : index
    %c0_5 = arith.constant 0 : index
    %5 = vector.load %arg3[%c0_4, %c0_5] : memref<512x128xf32, #tpu.memory_space<vmem>>, vector<512x128xf32>
    tpu.vector_store %arg3[%c0_4, %c0_5], %4 {strides = array<i32>} : memref<512x128xf32, #tpu.memory_space<vmem>>, vector<512x128xf32>,
    %cst_6 = arith.constant dense<0.000000e+00> : vector<128xf32>
    %6 = vector.multi_reduction <add>, %4, %cst_6 [0] : vector<512x128xf32> to vector<128xf32>
    %7 = vector.shape_cast %6 : vector<128xf32> to vector<1x128xf32>
    %8 = arith.mulf %4, %4 : vector<512x128xf32>
    %cst_7 = arith.constant dense<0.000000e+00> : vector<128xf32>
    %9 = vector.multi_reduction <add>, %8, %cst_7 [0] : vector<512x128xf32> to vector<128xf32>
    %10 = vector.shape_cast %9 : vector<128xf32> to vector<1x128xf32>
    %11 = tpu.concatenate %7, %10 in 0 : vector<1x128xf32>, vector<1x128xf32> -> vector<2x128xf32>
    %12 = vector.shape_cast %11 : vector<2x128xf32> to vector<1x2x128xf32>
    %c0_8 = arith.constant 0 : index
    %c0_9 = arith.constant 0 : index
    %c0_10 = arith.constant 0 : index
    %13 = vector.load %arg4[%c0_8, %c0_9, %c0_10] : memref<1x2x128xf32, #tpu.memory_space<vmem>>, vector<1x2x128xf32>
    tpu.vector_store %arg4[%c0_8, %c0_9, %c0_10], %12 {strides = array<i32>} : memref<1x2x128xf32, #tpu.memory_space<vmem>>, vector<1x2x128xf32>,
    return
  }
  func.func @transform_0(%arg0: i32) -> (i32, i32) {
    %c0_i32 = arith.constant 0 : i32
    %c0_i32_0 = arith.constant 0 : i32
    return %arg0, %c0_i32 : i32, i32
  }
  func.func @transform_1(%arg0: i32) -> (i32, i32) {
    %c0_i32 = arith.constant 0 : i32
    %c0_i32_0 = arith.constant 0 : i32
    %c0_i32_1 = arith.constant 0 : i32
    return %c0_i32, %c0_i32_0 : i32, i32
  }
  func.func @transform_2(%arg0: i32) -> (i32, i32) {
    %c0_i32 = arith.constant 0 : i32
    %c0_i32_0 = arith.constant 0 : i32
    return %arg0, %c0_i32 : i32, i32
  }
  func.func @transform_3(%arg0: i32) -> (i32, i32, i32) {
    %c0_i32 = arith.constant 0 : i32
    %c0_i32_0 = arith.constant 0 : i32
    %c0_i32_1 = arith.constant 0 : i32
    return %arg0, %c0_i32, %c0_i32_0 : i32, i32, i32
  }
}

</mosaic_0001>

<llo_original>
// kernel: tpu_custom_call.1
$region0: #{tpu_custom_call.1}
  #allocation0 [shape = 'u32[]', space=smem, size = 0x4, offset = 0x4, fixed_abs, tag = 'smem constant byte address 0x4 - core index']
  #allocation1 [shape = 'u32[72,128]{1,0:T(1,128)}', space=vmem, size = 0x9000, scoped, tag = 'internal scratch']
  %s0 = inlined_call_operand.hbm [shape: bf16[1024,128], index: 0, kind: input, shape index: {}]
  %s1 = inlined_call_operand.hbm [shape: bf16[128,128], index: 1, kind: input, shape index: {}]
  %s2 = inlined_call_operand.hbm [shape: f32[1024,128], index: 2, kind: output, shape index: {0}]
  %s3 = inlined_call_operand.hbm [shape: f32[2,2,128], index: 3, kind: output, shape index: {1}]
  %4 = xla_tuple %s2, %s3
  %s5 = sld [smem:[#allocation0]]
  $region57: #{tpu_custom_call.1} parent=0
    _
  %s7 = ssub.s32 1, %s5
  %s8 = scalar_select 0, %s7, %s5
  $region1: #{tpu_custom_call.1} parent=0
    #allocation2 [shape = 'u8[262144]{0}', space=vmem, size = 0x40000, scoped, tag = 'input window, operand 0']
    #allocation3 [shape = 's32[2]{0}', space=sflag, size = 0x8, scoped, tag = 'scoped memory for tpu_custom_call.1']
    #allocation4 [shape = 's32[2]{0}', space=sflag, size = 0x8, scoped, tag = 'scoped memory for tpu_custom_call.1']
    #allocation5 [shape = 'u8[32768]{0}', space=vmem, size = 0x8000, scoped, tag = 'input window, operand 1, single buffered']
    #allocation6 [shape = 's32[1]{0}', space=sflag, size = 0x4, scoped, tag = 'scoped memory for tpu_custom_call.1']
    #allocation7 [shape = 'u8[524288]{0}', space=vmem, size = 0x80000, scoped, tag = 'output window, operand 0']
    #allocation8 [shape = 'u8[2048]{0}', space=vmem, size = 0x800, scoped, tag = 'output window, operand 1']
    #allocation9 [shape = 's32[2]{0}', space=sflag, size = 0x8, scoped, tag = 'scoped memory for tpu_custom_call.1']
    %9 = vsyncpa [#allocation3], 0
    %s10 = scalar_lea.sflag [#allocation3], 1
    %11 = vsyncpa %s10, 0
    %12 = vsyncpa [#allocation6], 0
    %13 = vsyncpa [#allocation4], 0
    %s14 = scalar_lea.sflag [#allocation4], 1
    %15 = vsyncpa %s14, 0
    %16 = vsyncpa [#allocation9], 0
    %s17 = scalar_lea.sflag [#allocation9], 1
    %18 = vsyncpa %s17, 0
    loop: start=0, step=1, limit=4
    $region2: #{tpu_custom_call.1} parent=1 // loop_pre_header
      _
    $region3: #{tpu_custom_call.1} parent=1 // loop_header
      %s20 = sphi 0, %s24
      %p21 = scmp.ge.s32.totalorder %s20, 4
      %s30 = sphi 0, %s32
      %s33 = sphi 0, %s30
      %s34 = sphi 0, %s33
      %s50 = sphi 0, %s34
      %s54 = sphi 0, %s54
      %s56 = sphi 0, %s54
      %s57 = sphi 0, %s56
      %s71 = sphi 0, %s57
      %s77 = sphi 0, %s79
      %s80 = sphi 0, %s77
      %s81 = sphi 0, %s80
      %s97 = sphi 0, %s81
      %s103 = sphi 0, %s105
      %s106 = sphi 0, %s103
      %s107 = sphi 0, %s106
      %s123 = sphi 0, %s107
    $region4: #{tpu_custom_call.1} parent=1 // loop_header_branch
      %23 = sbr.rel (%p21) target = $region8
    $region5: #{tpu_custom_call.1} parent=1 // loop_body
      %s25 = ssub.s32 %s20, 1
      %s26 = ssub.s32 %s20, 2
      %s27 = sadd.s32 %s20, 1
      %s28 = ssub.s32 %s20, %s27
      %p29 = scmp.eq.s32.totalorder %s28, 0
      %s31 = sadd.s32 %s30, 1
      %s32 = scalar_select %p29, %s30, %s31
      %p35 = pneg %p29
      %p36 = scmp.eq.s32.totalorder %s20, 1
      %p37 = por %p35, %p36
      %p38 = scmp.ne.s32.totalorder %s30, %s33
      %p39 = scmp.eq.s32.totalorder %s20, 0
      %p40 = por %p38, %p39
      %p41 = scmp.ne.s32.totalorder %s30, %s33
      %p42 = scmp.eq.s32.totalorder %s25, 1
      %p43 = por %p41, %p42
      %p44 = scmp.ne.s32.totalorder %s33, %s34
      %p45 = scmp.eq.s32.totalorder %s25, 0
      %p46 = por %p44, %p45
      %p47 = scmp.ne.s32.totalorder %s33, %s34
      %p48 = scmp.eq.s32.totalorder %s26, 1
      %p49 = por %p47, %p48
      %p51 = scmp.ne.s32.totalorder %s34, %s50
      %p52 = scmp.eq.s32.totalorder %s26, 0
      %p53 = por %p51, %p52
      %s55 = sadd.s32 %s54, 1
      %p58 = scmp.eq.s32.totalorder %s20, 1
      %p59 = scmp.ne.s32.totalorder %s54, %s56
      %p60 = scmp.eq.s32.totalorder %s20, 0
      %p61 = por %p59, %p60
      %p62 = scmp.ne.s32.totalorder %s54, %s56
      %p63 = scmp.eq.s32.totalorder %s25, 1
      %p64 = por %p62, %p63
      %p65 = scmp.ne.s32.totalorder %s56, %s57
      %p66 = scmp.eq.s32.totalorder %s25, 0
      %p67 = por %p65, %p66
      %p68 = scmp.ne.s32.totalorder %s56, %s57
      %p69 = scmp.eq.s32.totalorder %s26, 1
      %p70 = por %p68, %p69
      %p72 = scmp.ne.s32.totalorder %s57, %s71
      %p73 = scmp.eq.s32.totalorder %s26, 0
      %p74 = por %p72, %p73
      %s75 = ssub.s32 %s20, %s27
      %p76 = scmp.eq.s32.totalorder %s75, 0
      %s78 = sadd.s32 %s77, 1
      %s79 = scalar_select %p76, %s77, %s78
      %p82 = pneg %p76
      %p83 = scmp.eq.s32.totalorder %s20, 1
      %p84 = por %p82, %p83
      %p85 = scmp.ne.s32.totalorder %s77, %s80
      %p86 = scmp.eq.s32.totalorder %s20, 0
      %p87 = por %p85, %p86
      %p88 = scmp.ne.s32.totalorder %s77, %s80
      %p89 = scmp.eq.s32.totalorder %s25, 1
      %p90 = por %p88, %p89
      %p91 = scmp.ne.s32.totalorder %s80, %s81
      %p92 = scmp.eq.s32.totalorder %s25, 0
      %p93 = por %p91, %p92
      %p94 = scmp.ne.s32.totalorder %s80, %s81
      %p95 = scmp.eq.s32.totalorder %s26, 1
      %p96 = por %p94, %p95
      %p98 = scmp.ne.s32.totalorder %s81, %s97
      %p99 = scmp.eq.s32.totalorder %s26, 0
      %p100 = por %p98, %p99
      %s101 = ssub.s32 %s20, %s27
      %p102 = scmp.eq.s32.totalorder %s101, 0
      %s104 = sadd.s32 %s103, 1
      %s105 = scalar_select %p102, %s103, %s104
      %p108 = pneg %p102
      %p109 = scmp.eq.s32.totalorder %s20, 1
      %p110 = por %p108, %p109
      %p111 = scmp.ne.s32.totalorder %s103, %s106
      %p112 = scmp.eq.s32.totalorder %s20, 0
      %p113 = por %p111, %p112
      %p114 = scmp.ne.s32.totalorder %s103, %s106
      %p115 = scmp.eq.s32.totalorder %s25, 1
      %p116 = por %p114, %p115
      %p117 = scmp.ne.s32.totalorder %s106, %s107
      %p118 = scmp.eq.s32.totalorder %s25, 0
      %p119 = por %p117, %p118
      %p120 = scmp.ne.s32.totalorder %s106, %s107
      %p121 = scmp.eq.s32.totalorder %s26, 1
      %p122 = por %p120, %p121
      %p124 = scmp.ne.s32.totalorder %s107, %s123
      %p125 = scmp.eq.s32.totalorder %s26, 0
      %p126 = por %p124, %p125
      %p127 = scmp.le.s32.totalorder 1, %s20
      %p128 = scmp.lt.s32.totalorder %s20, 3
      %p129 = pnand %p127, %p128
      %p130 = pneg %p129
      // Predicated region
      $region9: #{tpu_custom_call.1} parent=5 // pred_check
        _
      $region10: #{tpu_custom_call.1} parent=5 // pred_check_branch
        %132 = sbr.rel (%p129) target = $region12
      $region11: #{tpu_custom_call.1} parent=5 // pred_region
        %s133 = ssub.s32 %s20, 1
        // Predicated region
        $region13: #{tpu_custom_call.1} parent=11 // pred_check
          %p134 = pneg %p67
        $region14: #{tpu_custom_call.1} parent=11 // pred_check_branch
          %136 = sbr.rel (%p134) target = $region16
        $region15: #{tpu_custom_call.1} parent=11 // pred_region
          %138 = vsyncadd [#allocation6], 0
          %s139 = sshll.u32 %s1, 4
          %s140 = int_to_ptr.hbm [resolvable:$true] %s139
          %s141 = sshll.u32 [#allocation5], 4
          %s142 = int_to_ptr.vmem [resolvable:$true] %s141
          %147 = dma.hbm_to_vmem [thread:$0]  %s140, 1024, %s142, [#allocation6], 64, 64, 4
        $region16: #{tpu_custom_call.1} parent=11 // pred_fallthru
          _
      $region12: #{tpu_custom_call.1} parent=5 // pred_fallthru
        _
      %p148 = scmp.lt.s32.totalorder %s20, 2
      // Predicated region
      $region17: #{tpu_custom_call.1} parent=5 // pred_check
        %p149 = pneg %p148
      $region18: #{tpu_custom_call.1} parent=5 // pred_check_branch
        %151 = sbr.rel (%p149) target = $region20
      $region19: #{tpu_custom_call.1} parent=5 // pred_region
        // Predicated region
        $region21: #{tpu_custom_call.1} parent=19 // pred_check
          %p152 = pneg %p40
        $region22: #{tpu_custom_call.1} parent=19 // pred_check_branch
          %154 = sbr.rel (%p152) target = $region24
        $region23: #{tpu_custom_call.1} parent=19 // pred_region
          %s155 = sand.u32 %s30, 1
          %s156 = scalar_lea.sflag [#allocation3], %s155
          %s157 = sand.u32 %s30, 1
          %s158 = smul.addr %s157, 256
          %s159 = scalar_lea.vmem [#allocation2], %s158
          %s160 = smul.u32 64, %s20
          %162 = vsyncadd %s156, 0
          %s163 = smul.addr %s160, 4
          %s164 = scalar_lea.hbm %s0, %s163
          %s165 = sshll.u32 %s164, 4
          %s166 = int_to_ptr.hbm [resolvable:$true] %s165
          %s167 = sshll.u32 %s159, 4
          %s168 = int_to_ptr.vmem [resolvable:$true] %s167
          %173 = dma.hbm_to_vmem [thread:$0]  %s166, 4096, %s168, %s156, 64, 64, 4
        $region24: #{tpu_custom_call.1} parent=19 // pred_fallthru
          _
      $region20: #{tpu_custom_call.1} parent=5 // pred_fallthru
        _
      %p174 = scmp.le.s32.totalorder 1, %s20
      %p175 = scmp.lt.s32.totalorder %s20, 3
      %p176 = pnand %p174, %p175
      %p177 = pneg %p176
      // Predicated region
      $region25: #{tpu_custom_call.1} parent=5 // pred_check
        _
      $region26: #{tpu_custom_call.1} parent=5 // pred_check_branch
        %179 = sbr.rel (%p176) target = $region28
      $region27: #{tpu_custom_call.1} parent=5 // pred_region
        %s180 = ssub.s32 %s20, 1
        %s181 = sand.u32 %s33, 1
        %s182 = scalar_lea.sflag [#allocation3], %s181
        %s183 = sand.u32 %s33, 1
        %s184 = smul.addr %s183, 256
        %s185 = scalar_lea.vmem [#allocation2], %s184
        // Predicated region
        $region29: #{tpu_custom_call.1} parent=27 // pred_check
          %p186 = pneg %p46
        $region30: #{tpu_custom_call.1} parent=27 // pred_check_branch
          %188 = sbr.rel (%p186) target = $region32
        $region31: #{tpu_custom_call.1} parent=27 // pred_region
          %190 = dma.done %s182, 4096
        $region32: #{tpu_custom_call.1} parent=27 // pred_fallthru
          _
        // Predicated region
        $region33: #{tpu_custom_call.1} parent=27 // pred_check
          %p191 = pneg %p67
        $region34: #{tpu_custom_call.1} parent=27 // pred_check_branch
          %193 = sbr.rel (%p191) target = $region36
        $region35: #{tpu_custom_call.1} parent=27 // pred_region
          %195 = dma.done [#allocation6], 1024
        $region36: #{tpu_custom_call.1} parent=27 // pred_fallthru
          _
        %s196 = sand.u32 %s33, 1
        %s197 = scalar_lea.sflag [#allocation3], %s196
        %s198 = sand.u32 %s33, 1
        %s199 = smul.addr %s198, 256
        %s200 = scalar_lea.vmem [#allocation2], %s199
        %p201 = pneg %p46
        %p202 = pneg %p43
        %p203 = pneg %p67
        %p204 = pneg %p64
        %p205 = pneg %p93
        %p206 = pneg %p90
        %s207 = sand.u32 %s80, 1
        %s208 = scalar_lea.sflag [#allocation4], %s207
        %s209 = sand.u32 %s80, 1
        %s210 = smul.addr %s209, 512
        %s211 = scalar_lea.vmem [#allocation7], %s210
        %p212 = pneg %p119
        %p213 = pneg %p116
        %s214 = sand.u32 %s106, 1
        %s215 = scalar_lea.sflag [#allocation9], %s214
        %s216 = sand.u32 %s106, 1
        %s217 = smul.addr %s216, 2
        %s218 = scalar_lea.vmem [#allocation8], %s217
        %s219 = smul.u32 64, %s25
        %s220 = smul.u32 64, %s25
        %v221 = vld [vmem:[%s185] sm:$0xf]
        %v222 = vld [vmem:[%s185 + $0x4] sm:$0xf]
        %v223 = vld [vmem:[%s185 + $0x8] sm:$0xf]
        %v224 = vld [vmem:[%s185 + $0xc] sm:$0xf]
        %v225 = vld [vmem:[%s185 + $0x10] sm:$0xf]
        %v226 = vld [vmem:[%s185 + $0x14] sm:$0xf]
        %v227 = vld [vmem:[%s185 + $0x18] sm:$0xf]
        %v228 = vld [vmem:[%s185 + $0x1c] sm:$0xf]
        %v229 = vld [vmem:[%s185 + $0x20] sm:$0xf]
        %v230 = vld [vmem:[%s185 + $0x24] sm:$0xf]
        %v231 = vld [vmem:[%s185 + $0x28] sm:$0xf]
        %v232 = vld [vmem:[%s185 + $0x2c] sm:$0xf]
        %v233 = vld [vmem:[%s185 + $0x30] sm:$0xf]
        %v234 = vld [vmem:[%s185 + $0x34] sm:$0xf]
        %v235 = vld [vmem:[%s185 + $0x38] sm:$0xf]
        %v236 = vld [vmem:[%s185 + $0x3c] sm:$0xf]
        %v237 = vld [vmem:[%s185 + $0x40] sm:$0xf]
        %v238 = vld [vmem:[%s185 + $0x44] sm:$0xf]
        %v239 = vld [vmem:[%s185 + $0x48] sm:$0xf]
        %v240 = vld [vmem:[%s185 + $0x4c] sm:$0xf]
        %v241 = vld [vmem:[%s185 + $0x50] sm:$0xf]
        %v242 = vld [vmem:[%s185 + $0x54] sm:$0xf]
        %v243 = vld [vmem:[%s185 + $0x58] sm:$0xf]
        %v244 = vld [vmem:[%s185 + $0x5c] sm:$0xf]
        %v245 = vld [vmem:[%s185 + $0x60] sm:$0xf]
        %v246 = vld [vmem:[%s185 + $0x64] sm:$0xf]
        %v247 = vld [vmem:[%s185 + $0x68] sm:$0xf]
        %v248 = vld [vmem:[%s185 + $0x6c] sm:$0xf]
        %v249 = vld [vmem:[%s185 + $0x70] sm:$0xf]
        %v250 = vld [vmem:[%s185 + $0x74] sm:$0xf]
        %v251 = vld [vmem:[%s185 + $0x78] sm:$0xf]
        %v252 = vld [vmem:[%s185 + $0x7c] sm:$0xf]
        %v253 = vld [vmem:[%s185 + $0x80] sm:$0xf]
        %v254 = vld [vmem:[%s185 + $0x84] sm:$0xf]
        %v255 = vld [vmem:[%s185 + $0x88] sm:$0xf]
        %v256 = vld [vmem:[%s185 + $0x8c] sm:$0xf]
        %v257 = vld [vmem:[%s185 + $0x90] sm:$0xf]
        %v258 = vld [vmem:[%s185 + $0x94] sm:$0xf]
        %v259 = vld [vmem:[%s185 + $0x98] sm:$0xf]
        %v260 = vld [vmem:[%s185 + $0x9c] sm:$0xf]
        %v261 = vld [vmem:[%s185 + $0xa0] sm:$0xf]
        %v262 = vld [vmem:[%s185 + $0xa4] sm:$0xf]
        %v263 = vld [vmem:[%s185 + $0xa8] sm:$0xf]
        %v264 = vld [vmem:[%s185 + $0xac] sm:$0xf]
        %v265 = vld [vmem:[%s185 + $0xb0] sm:$0xf]
        %v266 = vld [vmem:[%s185 + $0xb4] sm:$0xf]
        %v267 = vld [vmem:[%s185 + $0xb8] sm:$0xf]
        %v268 = vld [vmem:[%s185 + $0xbc] sm:$0xf]
        %v269 = vld [vmem:[%s185 + $0xc0] sm:$0xf]
        %v270 = vld [vmem:[%s185 + $0xc4] sm:$0xf]
        %v271 = vld [vmem:[%s185 + $0xc8] sm:$0xf]
        %v272 = vld [vmem:[%s185 + $0xcc] sm:$0xf]
        %v273 = vld [vmem:[%s185 + $0xd0] sm:$0xf]
        %v274 = vld [vmem:[%s185 + $0xd4] sm:$0xf]
        %v275 = vld [vmem:[%s185 + $0xd8] sm:$0xf]
        %v276 = vld [vmem:[%s185 + $0xdc] sm:$0xf]
        %v277 = vld [vmem:[%s185 + $0xe0] sm:$0xf]
        %v278 = vld [vmem:[%s185 + $0xe4] sm:$0xf]
        %v279 = vld [vmem:[%s185 + $0xe8] sm:$0xf]
        %v280 = vld [vmem:[%s185 + $0xec] sm:$0xf]
        %v281 = vld [vmem:[%s185 + $0xf0] sm:$0xf]
        %v282 = vld [vmem:[%s185 + $0xf4] sm:$0xf]
        %v283 = vld [vmem:[%s185 + $0xf8] sm:$0xf]
        %v284 = vld [vmem:[%s185 + $0xfc] sm:$0xf]
        %v285 = vld [vmem:[#allocation5] sm:$0xf]
        %v286 = vld [vmem:[#allocation5 + $0x4] sm:$0xf]
        %v287 = vld [vmem:[#allocation5 + $0x8] sm:$0xf]
        %v288 = vld [vmem:[#allocation5 + $0xc] sm:$0xf]
        %v289 = vld [vmem:[#allocation5 + $0x10] sm:$0xf]
        %v290 = vld [vmem:[#allocation5 + $0x14] sm:$0xf]
        %v291 = vld [vmem:[#allocation5 + $0x18] sm:$0xf]
        %v292 = vld [vmem:[#allocation5 + $0x1c] sm:$0xf]
        %v293 = vld [vmem:[#allocation5 + $0x20] sm:$0xf]
        %v294 = vld [vmem:[#allocation5 + $0x24] sm:$0xf]
        %v295 = vld [vmem:[#allocation5 + $0x28] sm:$0xf]
        %v296 = vld [vmem:[#allocation5 + $0x2c] sm:$0xf]
        %v297 = vld [vmem:[#allocation5 + $0x30] sm:$0xf]
        %v298 = vld [vmem:[#allocation5 + $0x34] sm:$0xf]
        %v299 = vld [vmem:[#allocation5 + $0x38] sm:$0xf]
        %v300 = vld [vmem:[#allocation5 + $0x3c] sm:$0xf]
        %v365 = vunpack.c.l.b16 %v221
        %v366 = vunpack.c.l.b16 %v222
        %v367 = vunpack.c.l.b16 %v223
        %v368 = vunpack.c.l.b16 %v224
        %v369 = vunpack.c.l.b16 %v225
        %v370 = vunpack.c.l.b16 %v226
        %v371 = vunpack.c.l.b16 %v227
        %v372 = vunpack.c.l.b16 %v228
        %v373 = vunpack.c.l.b16 %v229
        %v374 = vunpack.c.l.b16 %v230
        %v375 = vunpack.c.l.b16 %v231
        %v376 = vunpack.c.l.b16 %v232
        %v377 = vunpack.c.l.b16 %v233
        %v378 = vunpack.c.l.b16 %v234
        %v379 = vunpack.c.l.b16 %v235
        %v380 = vunpack.c.l.b16 %v236
        %v381 = vunpack.c.l.b16 %v237
        %v382 = vunpack.c.l.b16 %v238
        %v383 = vunpack.c.l.b16 %v239
        %v384 = vunpack.c.l.b16 %v240
        %v385 = vunpack.c.l.b16 %v241
        %v386 = vunpack.c.l.b16 %v242
        %v387 = vunpack.c.l.b16 %v243
        %v388 = vunpack.c.l.b16 %v244
        %v389 = vunpack.c.l.b16 %v245
        %v390 = vunpack.c.l.b16 %v246
        %v391 = vunpack.c.l.b16 %v247
        %v392 = vunpack.c.l.b16 %v248
        %v393 = vunpack.c.l.b16 %v249
        %v394 = vunpack.c.l.b16 %v250
        %v395 = vunpack.c.l.b16 %v251
        %v396 = vunpack.c.l.b16 %v252
        %v397 = vunpack.c.l.b16 %v253
        %v398 = vunpack.c.l.b16 %v254
        %v399 = vunpack.c.l.b16 %v255
        %v400 = vunpack.c.l.b16 %v256
        %v401 = vunpack.c.l.b16 %v257
        %v402 = vunpack.c.l.b16 %v258
        %v403 = vunpack.c.l.b16 %v259
        %v404 = vunpack.c.l.b16 %v260
        %v405 = vunpack.c.l.b16 %v261
        %v406 = vunpack.c.l.b16 %v262
        %v407 = vunpack.c.l.b16 %v263
        %v408 = vunpack.c.l.b16 %v264
        %v409 = vunpack.c.l.b16 %v265
        %v410 = vunpack.c.l.b16 %v266
        %v411 = vunpack.c.l.b16 %v267
        %v412 = vunpack.c.l.b16 %v268
        %v413 = vunpack.c.l.b16 %v269
        %v414 = vunpack.c.l.b16 %v270
        %v415 = vunpack.c.l.b16 %v271
        %v416 = vunpack.c.l.b16 %v272
        %v417 = vunpack.c.l.b16 %v273
        %v418 = vunpack.c.l.b16 %v274
        %v419 = vunpack.c.l.b16 %v275
        %v420 = vunpack.c.l.b16 %v276
        %v421 = vunpack.c.l.b16 %v277
        %v422 = vunpack.c.l.b16 %v278
        %v423 = vunpack.c.l.b16 %v279
        %v424 = vunpack.c.l.b16 %v280
        %v425 = vunpack.c.l.b16 %v281
        %v426 = vunpack.c.l.b16 %v282
        %v427 = vunpack.c.l.b16 %v283
        %v428 = vunpack.c.l.b16 %v284
        %v429 = vpack.c.b16 %v366, %v365
        %v430 = vpack.c.b16 %v368, %v367
        %v431 = vpack.c.b16 %v370, %v369
        %v432 = vpack.c.b16 %v372, %v371
        %v433 = vpack.c.b16 %v374, %v373
        %v434 = vpack.c.b16 %v376, %v375
        %v435 = vpack.c.b16 %v378, %v377
        %v436 = vpack.c.b16 %v380, %v379
        %v437 = vpack.c.b16 %v382, %v381
        %v438 = vpack.c.b16 %v384, %v383
        %v439 = vpack.c.b16 %v386, %v385
        %v440 = vpack.c.b16 %v388, %v387
        %v441 = vpack.c.b16 %v390, %v389
        %v442 = vpack.c.b16 %v392, %v391
        %v443 = vpack.c.b16 %v394, %v393
        %v444 = vpack.c.b16 %v396, %v395
        %v445 = vpack.c.b16 %v398, %v397
        %v446 = vpack.c.b16 %v400, %v399
        %v447 = vpack.c.b16 %v402, %v401
        %v448 = vpack.c.b16 %v404, %v403
        %v449 = vpack.c.b16 %v406, %v405
        %v450 = vpack.c.b16 %v408, %v407
        %v451 = vpack.c.b16 %v410, %v409
        %v452 = vpack.c.b16 %v412, %v411
        %v453 = vpack.c.b16 %v414, %v413
        %v454 = vpack.c.b16 %v416, %v415
        %v455 = vpack.c.b16 %v418, %v417
        %v456 = vpack.c.b16 %v420, %v419
        %v457 = vpack.c.b16 %v422, %v421
        %v458 = vpack.c.b16 %v424, %v423
        %v459 = vpack.c.b16 %v426, %v425
        %v460 = vpack.c.b16 %v428, %v427
        %v509 = vunpack.c.l.b16 %v285
        %v510 = vunpack.c.l.b16 %v286
        %v511 = vunpack.c.l.b16 %v287
        %v512 = vunpack.c.l.b16 %v288
        %v513 = vunpack.c.l.b16 %v289
        %v514 = vunpack.c.l.b16 %v290
        %v515 = vunpack.c.l.b16 %v291
        %v516 = vunpack.c.l.b16 %v292
        %v517 = vunpack.c.l.b16 %v293
        %v518 = vunpack.c.l.b16 %v294
        %v519 = vunpack.c.l.b16 %v295
        %v520 = vunpack.c.l.b16 %v296
        %v521 = vunpack.c.l.b16 %v297
        %v522 = vunpack.c.l.b16 %v298
        %v523 = vunpack.c.l.b16 %v299
        %v524 = vunpack.c.l.b16 %v300
        %v525 = vpack.c.b16 %v510, %v509
        %v526 = vpack.c.b16 %v512, %v511
        %v527 = vpack.c.b16 %v514, %v513
        %v528 = vpack.c.b16 %v516, %v515
        %v529 = vpack.c.b16 %v518, %v517
        %v530 = vpack.c.b16 %v520, %v519
        %v531 = vpack.c.b16 %v522, %v521
        %v532 = vpack.c.b16 %v524, %v523
        %541 = vmatpush.bf16.msra.mxu0 %v532
        %542 = vmatpush.bf16.msra.mxu0 %v531
        %543 = vmatpush.bf16.msra.mxu0 %v530
        %544 = vmatpush.bf16.msra.mxu0 %v529
        %545 = vmatpush.bf16.msra.mxu0 %v528
        %546 = vmatpush.bf16.msra.mxu0 %v527
        %547 = vmatpush.bf16.msra.mxu0 %v526
        %548 = vmatpush.bf16.msra.mxu0 %v525
        %549 = vmatmul.bf16.gmra.mxu0 %v429
        %v550 = vpop.f32.mrf.mxu0
        %v551 = vadd.f32 0.0, %v550
        %v552 = vpop.f32.mrf.mxu0
        %v553 = vadd.f32 0.0, %v552
        %554 = vmatmul.bf16.gmra.mxu0 %v430
        %v555 = vpop.f32.mrf.mxu0
        %v556 = vadd.f32 0.0, %v555
        %v557 = vpop.f32.mrf.mxu0
        %v558 = vadd.f32 0.0, %v557
        %559 = vmatmul.bf16.gmra.mxu0 %v431
        %v560 = vpop.f32.mrf.mxu0
        %v561 = vadd.f32 0.0, %v560
        %v562 = vpop.f32.mrf.mxu0
        %v563 = vadd.f32 0.0, %v562
        %564 = vmatmul.bf16.gmra.mxu0 %v432
        %v565 = vpop.f32.mrf.mxu0
        %v566 = vadd.f32 0.0, %v565
        %v567 = vpop.f32.mrf.mxu0
        %v568 = vadd.f32 0.0, %v567
        %569 = vmatmul.bf16.gmra.mxu0 %v433
        %v570 = vpop.f32.mrf.mxu0
        %v571 = vadd.f32 0.0, %v570
        %v572 = vpop.f32.mrf.mxu0
        %v573 = vadd.f32 0.0, %v572
        %574 = vmatmul.bf16.gmra.mxu0 %v434
        %v575 = vpop.f32.mrf.mxu0
        %v576 = vadd.f32 0.0, %v575
        %v577 = vpop.f32.mrf.mxu0
        %v578 = vadd.f32 0.0, %v577
        %579 = vmatmul.bf16.gmra.mxu0 %v435
        %v580 = vpop.f32.mrf.mxu0
        %v581 = vadd.f32 0.0, %v580
        %v582 = vpop.f32.mrf.mxu0
        %v583 = vadd.f32 0.0, %v582
        %584 = vmatmul.bf16.gmra.mxu0 %v436
        %v585 = vpop.f32.mrf.mxu0
        %v586 = vadd.f32 0.0, %v585
        %v587 = vpop.f32.mrf.mxu0
        %v588 = vadd.f32 0.0, %v587
        %589 = vmatmul.bf16.gmra.mxu0 %v437
        %v590 = vpop.f32.mrf.mxu0
        %v591 = vadd.f32 0.0, %v590
        %v592 = vpop.f32.mrf.mxu0
        %v593 = vadd.f32 0.0, %v592
        %594 = vmatmul.bf16.gmra.mxu0 %v438
        %v595 = vpop.f32.mrf.mxu0
        %v596 = vadd.f32 0.0, %v595
        %v597 = vpop.f32.mrf.mxu0
        %v598 = vadd.f32 0.0, %v597
        %599 = vmatmul.bf16.gmra.mxu0 %v439
        %v600 = vpop.f32.mrf.mxu0
        %v601 = vadd.f32 0.0, %v600
        %v602 = vpop.f32.mrf.mxu0
        %v603 = vadd.f32 0.0, %v602
        %604 = vmatmul.bf16.gmra.mxu0 %v440
        %v605 = vpop.f32.mrf.mxu0
        %v606 = vadd.f32 0.0, %v605
        %v607 = vpop.f32.mrf.mxu0
        %v608 = vadd.f32 0.0, %v607
        %609 = vmatmul.bf16.gmra.mxu0 %v441
        %v610 = vpop.f32.mrf.mxu0
        %v611 = vadd.f32 0.0, %v610
        %v612 = vpop.f32.mrf.mxu0
        %v613 = vadd.f32 0.0, %v612
        %614 = vmatmul.bf16.gmra.mxu0 %v442
        %v615 = vpop.f32.mrf.mxu0
        %v616 = vadd.f32 0.0, %v615
        %v617 = vpop.f32.mrf.mxu0
        %v618 = vadd.f32 0.0, %v617
        %619 = vmatmul.bf16.gmra.mxu0 %v443
        %v620 = vpop.f32.mrf.mxu0
        %v621 = vadd.f32 0.0, %v620
        %v622 = vpop.f32.mrf.mxu0
        %v623 = vadd.f32 0.0, %v622
        %624 = vmatmul.bf16.gmra.mxu0 %v444
        %v625 = vpop.f32.mrf.mxu0
        %v626 = vadd.f32 0.0, %v625
        %v627 = vpop.f32.mrf.mxu0
        %v628 = vadd.f32 0.0, %v627
        %629 = vmatmul.bf16.gmra.mxu0 %v445
        %v630 = vpop.f32.mrf.mxu0
        %v631 = vadd.f32 0.0, %v630
        %v632 = vpop.f32.mrf.mxu0
        %v633 = vadd.f32 0.0, %v632
        %634 = vmatmul.bf16.gmra.mxu0 %v446
        %v635 = vpop.f32.mrf.mxu0
        %v636 = vadd.f32 0.0, %v635
        %v637 = vpop.f32.mrf.mxu0
        %v638 = vadd.f32 0.0, %v637
        %639 = vmatmul.bf16.gmra.mxu0 %v447
        %v640 = vpop.f32.mrf.mxu0
        %v641 = vadd.f32 0.0, %v640
        %v642 = vpop.f32.mrf.mxu0
        %v643 = vadd.f32 0.0, %v642
        %644 = vmatmul.bf16.gmra.mxu0 %v448
        %v645 = vpop.f32.mrf.mxu0
        %v646 = vadd.f32 0.0, %v645
        %v647 = vpop.f32.mrf.mxu0
        %v648 = vadd.f32 0.0, %v647
        %649 = vmatmul.bf16.gmra.mxu0 %v449
        %v650 = vpop.f32.mrf.mxu0
        %v651 = vadd.f32 0.0, %v650
        %v652 = vpop.f32.mrf.mxu0
        %v653 = vadd.f32 0.0, %v652
        %654 = vmatmul.bf16.gmra.mxu0 %v450
        %v655 = vpop.f32.mrf.mxu0
        %v656 = vadd.f32 0.0, %v655
        %v657 = vpop.f32.mrf.mxu0
        %v658 = vadd.f32 0.0, %v657
        %659 = vmatmul.bf16.gmra.mxu0 %v451
        %v660 = vpop.f32.mrf.mxu0
        %v661 = vadd.f32 0.0, %v660
        %v662 = vpop.f32.mrf.mxu0
        %v663 = vadd.f32 0.0, %v662
        %664 = vmatmul.bf16.gmra.mxu0 %v452
        %v665 = vpop.f32.mrf.mxu0
        %v666 = vadd.f32 0.0, %v665
        %v667 = vpop.f32.mrf.mxu0
        %v668 = vadd.f32 0.0, %v667
        %669 = vmatmul.bf16.gmra.mxu0 %v453
        %v670 = vpop.f32.mrf.mxu0
        %v671 = vadd.f32 0.0, %v670
        %v672 = vpop.f32.mrf.mxu0
        %v673 = vadd.f32 0.0, %v672
        %674 = vmatmul.bf16.gmra.mxu0 %v454
        %v675 = vpop.f32.mrf.mxu0
        %v676 = vadd.f32 0.0, %v675
        %v677 = vpop.f32.mrf.mxu0
        %v678 = vadd.f32 0.0, %v677
        %679 = vmatmul.bf16.gmra.mxu0 %v455
        %v680 = vpop.f32.mrf.mxu0
        %v681 = vadd.f32 0.0, %v680
        %v682 = vpop.f32.mrf.mxu0
        %v683 = vadd.f32 0.0, %v682
        %684 = vmatmul.bf16.gmra.mxu0 %v456
        %v685 = vpop.f32.mrf.mxu0
        %v686 = vadd.f32 0.0, %v685
        %v687 = vpop.f32.mrf.mxu0
        %v688 = vadd.f32 0.0, %v687
        %689 = vmatmul.bf16.gmra.mxu0 %v457
        %v690 = vpop.f32.mrf.mxu0
        %v691 = vadd.f32 0.0, %v690
        %v692 = vpop.f32.mrf.mxu0
        %v693 = vadd.f32 0.0, %v692
        %694 = vmatmul.bf16.gmra.mxu0 %v458
        %v695 = vpop.f32.mrf.mxu0
        %v696 = vadd.f32 0.0, %v695
        %v697 = vpop.f32.mrf.mxu0
        %v698 = vadd.f32 0.0, %v697
        %699 = vmatmul.bf16.gmra.mxu0 %v459
        %v700 = vpop.f32.mrf.mxu0
        %v701 = vadd.f32 0.0, %v700
        %v702 = vpop.f32.mrf.mxu0
        %v703 = vadd.f32 0.0, %v702
        %704 = vmatmul.bf16.gmra.mxu0 %v460
        %v705 = vpop.f32.mrf.mxu0
        %v706 = vadd.f32 0.0, %v705
        %v707 = vpop.f32.mrf.mxu0
        %v708 = vadd.f32 0.0, %v707
        %709 = vdwg.mxu0
        %v710 = vmax.f32 %v551, 0.0
        %v711 = vmax.f32 %v553, 0.0
        %v712 = vmax.f32 %v556, 0.0
        %v713 = vmax.f32 %v558, 0.0
        %v714 = vmax.f32 %v561, 0.0
        %v715 = vmax.f32 %v563, 0.0
        %v716 = vmax.f32 %v566, 0.0
        %v717 = vmax.f32 %v568, 0.0
        %v718 = vmax.f32 %v571, 0.0
        %v719 = vmax.f32 %v573, 0.0
        %v720 = vmax.f32 %v576, 0.0
        %v721 = vmax.f32 %v578, 0.0
        %v722 = vmax.f32 %v581, 0.0
        %v723 = vmax.f32 %v583, 0.0
        %v724 = vmax.f32 %v586, 0.0
        %v725 = vmax.f32 %v588, 0.0
        %v726 = vmax.f32 %v591, 0.0
        %v727 = vmax.f32 %v593, 0.0
        %v728 = vmax.f32 %v596, 0.0
        %v729 = vmax.f32 %v598, 0.0
        %v730 = vmax.f32 %v601, 0.0
        %v731 = vmax.f32 %v603, 0.0
        %v732 = vmax.f32 %v606, 0.0
        %v733 = vmax.f32 %v608, 0.0
        %v734 = vmax.f32 %v611, 0.0
        %v735 = vmax.f32 %v613, 0.0
        %v736 = vmax.f32 %v616, 0.0
        %v737 = vmax.f32 %v618, 0.0
        %v738 = vmax.f32 %v621, 0.0
        %v739 = vmax.f32 %v623, 0.0
        %v740 = vmax.f32 %v626, 0.0
        %v741 = vmax.f32 %v628, 0.0
        %v742 = vmax.f32 %v631, 0.0
        %v743 = vmax.f32 %v633, 0.0
        %v744 = vmax.f32 %v636, 0.0
        %v745 = vmax.f32 %v638, 0.0
        %v746 = vmax.f32 %v641, 0.0
        %v747 = vmax.f32 %v643, 0.0
        %v748 = vmax.f32 %v646, 0.0
        %v749 = vmax.f32 %v648, 0.0
        %v750 = vmax.f32 %v651, 0.0
        %v751 = vmax.f32 %v653, 0.0
        %v752 = vmax.f32 %v656, 0.0
        %v753 = vmax.f32 %v658, 0.0
        %v754 = vmax.f32 %v661, 0.0
        %v755 = vmax.f32 %v663, 0.0
        %v756 = vmax.f32 %v666, 0.0
        %v757 = vmax.f32 %v668, 0.0
        %v758 = vmax.f32 %v671, 0.0
        %v759 = vmax.f32 %v673, 0.0
        %v760 = vmax.f32 %v676, 0.0
        %v761 = vmax.f32 %v678, 0.0
        %v762 = vmax.f32 %v681, 0.0
        %v763 = vmax.f32 %v683, 0.0
        %v764 = vmax.f32 %v686, 0.0
        %v765 = vmax.f32 %v688, 0.0
        %v766 = vmax.f32 %v691, 0.0
        %v767 = vmax.f32 %v693, 0.0
        %v768 = vmax.f32 %v696, 0.0
        %v769 = vmax.f32 %v698, 0.0
        %v770 = vmax.f32 %v701, 0.0
        %v771 = vmax.f32 %v703, 0.0
        %v772 = vmax.f32 %v706, 0.0
        %v773 = vmax.f32 %v708, 0.0
        %774 = vst [vmem:[%s211] sm:$0xff] %v710
        %775 = vst [vmem:[%s211 + $0x8] sm:$0xff] %v711
        %776 = vst [vmem:[%s211 + $0x10] sm:$0xff] %v712
        %777 = vst [vmem:[%s211 + $0x18] sm:$0xff] %v713
        %778 = vst [vmem:[%s211 + $0x20] sm:$0xff] %v714
        %779 = vst [vmem:[%s211 + $0x28] sm:$0xff] %v715
        %780 = vst [vmem:[%s211 + $0x30] sm:$0xff] %v716
        %781 = vst [vmem:[%s211 + $0x38] sm:$0xff] %v717
        %782 = vst [vmem:[%s211 + $0x40] sm:$0xff] %v718
        %783 = vst [vmem:[%s211 + $0x48] sm:$0xff] %v719
        %784 = vst [vmem:[%s211 + $0x50] sm:$0xff] %v720
        %785 = vst [vmem:[%s211 + $0x58] sm:$0xff] %v721
        %786 = vst [vmem:[%s211 + $0x60] sm:$0xff] %v722
        %787 = vst [vmem:[%s211 + $0x68] sm:$0xff] %v723
        %788 = vst [vmem:[%s211 + $0x70] sm:$0xff] %v724
        %789 = vst [vmem:[%s211 + $0x78] sm:$0xff] %v725
        %790 = vst [vmem:[%s211 + $0x80] sm:$0xff] %v726
        %791 = vst [vmem:[%s211 + $0x88] sm:$0xff] %v727
        %792 = vst [vmem:[%s211 + $0x90] sm:$0xff] %v728
        %793 = vst [vmem:[%s211 + $0x98] sm:$0xff] %v729
        %794 = vst [vmem:[%s211 + $0xa0] sm:$0xff] %v730
        %795 = vst [vmem:[%s211 + $0xa8] sm:$0xff] %v731
        %796 = vst [vmem:[%s211 + $0xb0] sm:$0xff] %v732
        %797 = vst [vmem:[%s211 + $0xb8] sm:$0xff] %v733
        %798 = vst [vmem:[%s211 + $0xc0] sm:$0xff] %v734
        %799 = vst [vmem:[%s211 + $0xc8] sm:$0xff] %v735
        %800 = vst [vmem:[%s211 + $0xd0] sm:$0xff] %v736
        %801 = vst [vmem:[%s211 + $0xd8] sm:$0xff] %v737
        %802 = vst [vmem:[%s211 + $0xe0] sm:$0xff] %v738
        %803 = vst [vmem:[%s211 + $0xe8] sm:$0xff] %v739
        %804 = vst [vmem:[%s211 + $0xf0] sm:$0xff] %v740
        %805 = vst [vmem:[%s211 + $0xf8] sm:$0xff] %v741
        %806 = vst [vmem:[%s211 + $0x100] sm:$0xff] %v742
        %807 = vst [vmem:[%s211 + $0x108] sm:$0xff] %v743
        %808 = vst [vmem:[%s211 + $0x110] sm:$0xff] %v744
        %809 = vst [vmem:[%s211 + $0x118] sm:$0xff] %v745
        %810 = vst [vmem:[%s211 + $0x120] sm:$0xff] %v746
        %811 = vst [vmem:[%s211 + $0x128] sm:$0xff] %v747
        %812 = vst [vmem:[%s211 + $0x130] sm:$0xff] %v748
        %813 = vst [vmem:[%s211 + $0x138] sm:$0xff] %v749
        %814 = vst [vmem:[%s211 + $0x140] sm:$0xff] %v750
        %815 = vst [vmem:[%s211 + $0x148] sm:$0xff] %v751
        %816 = vst [vmem:[%s211 + $0x150] sm:$0xff] %v752
        %817 = vst [vmem:[%s211 + $0x158] sm:$0xff] %v753
        %818 = vst [vmem:[%s211 + $0x160] sm:$0xff] %v754
        %819 = vst [vmem:[%s211 + $0x168] sm:$0xff] %v755
        %820 = vst [vmem:[%s211 + $0x170] sm:$0xff] %v756
        %821 = vst [vmem:[%s211 + $0x178] sm:$0xff] %v757
        %822 = vst [vmem:[%s211 + $0x180] sm:$0xff] %v758
        %823 = vst [vmem:[%s211 + $0x188] sm:$0xff] %v759
        %824 = vst [vmem:[%s211 + $0x190] sm:$0xff] %v760
        %825 = vst [vmem:[%s211 + $0x198] sm:$0xff] %v761
        %826 = vst [vmem:[%s211 + $0x1a0] sm:$0xff] %v762
        %827 = vst [vmem:[%s211 + $0x1a8] sm:$0xff] %v763
        %828 = vst [vmem:[%s211 + $0x1b0] sm:$0xff] %v764
        %829 = vst [vmem:[%s211 + $0x1b8] sm:$0xff] %v765
        %830 = vst [vmem:[%s211 + $0x1c0] sm:$0xff] %v766
        %831 = vst [vmem:[%s211 + $0x1c8] sm:$0xff] %v767
        %832 = vst [vmem:[%s211 + $0x1d0] sm:$0xff] %v768
        %833 = vst [vmem:[%s211 + $0x1d8] sm:$0xff] %v769
        %834 = vst [vmem:[%s211 + $0x1e0] sm:$0xff] %v770
        %835 = vst [vmem:[%s211 + $0x1e8] sm:$0xff] %v771
        %836 = vst [vmem:[%s211 + $0x1f0] sm:$0xff] %v772
        %837 = vst [vmem:[%s211 + $0x1f8] sm:$0xff] %v773
        %v838 = vadd.f32 %v710, %v711
        %v839 = vadd.f32 %v838, %v712
        %v840 = vadd.f32 %v839, %v713
        %v841 = vadd.f32 %v840, %v714
        %v842 = vadd.f32 %v841, %v715
        %v843 = vadd.f32 %v842, %v716
        %v844 = vadd.f32 %v843, %v717
        %v845 = vadd.f32 %v844, %v718
        %v846 = vadd.f32 %v845, %v719
        %v847 = vadd.f32 %v846, %v720
        %v848 = vadd.f32 %v847, %v721
        %v849 = vadd.f32 %v848, %v722
        %v850 = vadd.f32 %v849, %v723
        %v851 = vadd.f32 %v850, %v724
        %v852 = vadd.f32 %v851, %v725
        %v853 = vadd.f32 %v852, %v726
        %v854 = vadd.f32 %v853, %v727
        %v855 = vadd.f32 %v854, %v728
        %v856 = vadd.f32 %v855, %v729
        %v857 = vadd.f32 %v856, %v730
        %v858 = vadd.f32 %v857, %v731
        %v859 = vadd.f32 %v858, %v732
        %v860 = vadd.f32 %v859, %v733
        %v861 = vadd.f32 %v860, %v734
        %v862 = vadd.f32 %v861, %v735
        %v863 = vadd.f32 %v862, %v736
        %v864 = vadd.f32 %v863, %v737
        %v865 = vadd.f32 %v864, %v738
        %v866 = vadd.f32 %v865, %v739
        %v867 = vadd.f32 %v866, %v740
        %v868 = vadd.f32 %v867, %v741
        %v869 = vadd.f32 %v868, %v742
        %v870 = vadd.f32 %v869, %v743
        %v871 = vadd.f32 %v870, %v744
        %v872 = vadd.f32 %v871, %v745
        %v873 = vadd.f32 %v872, %v746
        %v874 = vadd.f32 %v873, %v747
        %v875 = vadd.f32 %v874, %v748
        %v876 = vadd.f32 %v875, %v749
        %v877 = vadd.f32 %v876, %v750
        %v878 = vadd.f32 %v877, %v751
        %v879 = vadd.f32 %v878, %v752
        %v880 = vadd.f32 %v879, %v753
        %v881 = vadd.f32 %v880, %v754
        %v882 = vadd.f32 %v881, %v755
        %v883 = vadd.f32 %v882, %v756
        %v884 = vadd.f32 %v883, %v757
        %v885 = vadd.f32 %v884, %v758
        %v886 = vadd.f32 %v885, %v759
        %v887 = vadd.f32 %v886, %v760
        %v888 = vadd.f32 %v887, %v761
        %v889 = vadd.f32 %v888, %v762
        %v890 = vadd.f32 %v889, %v763
        %v891 = vadd.f32 %v890, %v764
        %v892 = vadd.f32 %v891, %v765
        %v893 = vadd.f32 %v892, %v766
        %v894 = vadd.f32 %v893, %v767
        %v895 = vadd.f32 %v894, %v768
        %v896 = vadd.f32 %v895, %v769
        %v897 = vadd.f32 %v896, %v770
        %v898 = vadd.f32 %v897, %v771
        %v899 = vadd.f32 %v898, %v772
        %v900 = vadd.f32 %v899, %v773
        %v901 = vrot.slane %v900, 4
        %v902 = vadd.f32 %v900, %v901
        %v903 = vrot.slane %v902, 2
        %v904 = vadd.f32 %v902, %v903
        %v905 = vrot.slane %v904, 1
        %v906 = vadd.f32 %v904, %v905
        %v907 = vmul.f32 %v710, %v710
        %v908 = vmul.f32 %v711, %v711
        %v909 = vmul.f32 %v712, %v712
        %v910 = vmul.f32 %v713, %v713
        %v911 = vmul.f32 %v714, %v714
        %v912 = vmul.f32 %v715, %v715
        %v913 = vmul.f32 %v716, %v716
        %v914 = vmul.f32 %v717, %v717
        %v915 = vmul.f32 %v718, %v718
        %v916 = vmul.f32 %v719, %v719
        %v917 = vmul.f32 %v720, %v720
        %v918 = vmul.f32 %v721, %v721
        %v919 = vmul.f32 %v722, %v722
        %v920 = vmul.f32 %v723, %v723
        %v921 = vmul.f32 %v724, %v724
        %v922 = vmul.f32 %v725, %v725
        %v923 = vmul.f32 %v726, %v726
        %v924 = vmul.f32 %v727, %v727
        %v925 = vmul.f32 %v728, %v728
        %v926 = vmul.f32 %v729, %v729
        %v927 = vmul.f32 %v730, %v730
        %v928 = vmul.f32 %v731, %v731
        %v929 = vmul.f32 %v732, %v732
        %v930 = vmul.f32 %v733, %v733
        %v931 = vmul.f32 %v734, %v734
        %v932 = vmul.f32 %v735, %v735
        %v933 = vmul.f32 %v736, %v736
        %v934 = vmul.f32 %v737, %v737
        %v935 = vmul.f32 %v738, %v738
        %v936 = vmul.f32 %v739, %v739
        %v937 = vmul.f32 %v740, %v740
        %v938 = vmul.f32 %v741, %v741
        %v939 = vmul.f32 %v742, %v742
        %v940 = vmul.f32 %v743, %v743
        %v941 = vmul.f32 %v744, %v744
        %v942 = vmul.f32 %v745, %v745
        %v943 = vmul.f32 %v746, %v746
        %v944 = vmul.f32 %v747, %v747
        %v945 = vmul.f32 %v748, %v748
        %v946 = vmul.f32 %v749, %v749
        %v947 = vmul.f32 %v750, %v750
        %v948 = vmul.f32 %v751, %v751
        %v949 = vmul.f32 %v752, %v752
        %v950 = vmul.f32 %v753, %v753
        %v951 = vmul.f32 %v754, %v754
        %v952 = vmul.f32 %v755, %v755
        %v953 = vmul.f32 %v756, %v756
        %v954 = vmul.f32 %v757, %v757
        %v955 = vmul.f32 %v758, %v758
        %v956 = vmul.f32 %v759, %v759
        %v957 = vmul.f32 %v760, %v760
        %v958 = vmul.f32 %v761, %v761
        %v959 = vmul.f32 %v762, %v762
        %v960 = vmul.f32 %v763, %v763
        %v961 = vmul.f32 %v764, %v764
        %v962 = vmul.f32 %v765, %v765
        %v963 = vmul.f32 %v766, %v766
        %v964 = vmul.f32 %v767, %v767
        %v965 = vmul.f32 %v768, %v768
        %v966 = vmul.f32 %v769, %v769
        %v967 = vmul.f32 %v770, %v770
        %v968 = vmul.f32 %v771, %v771
        %v969 = vmul.f32 %v772, %v772
        %v970 = vmul.f32 %v773, %v773
        %v971 = vadd.f32 %v907, %v908
        %v972 = vadd.f32 %v971, %v909
        %v973 = vadd.f32 %v972, %v910
        %v974 = vadd.f32 %v973, %v911
        %v975 = vadd.f32 %v974, %v912
        %v976 = vadd.f32 %v975, %v913
        %v977 = vadd.f32 %v976, %v914
        %v978 = vadd.f32 %v977, %v915
        %v979 = vadd.f32 %v978, %v916
        %v980 = vadd.f32 %v979, %v917
        %v981 = vadd.f32 %v980, %v918
        %v982 = vadd.f32 %v981, %v919
        %v983 = vadd.f32 %v982, %v920
        %v984 = vadd.f32 %v983, %v921
        %v985 = vadd.f32 %v984, %v922
        %v986 = vadd.f32 %v985, %v923
        %v987 = vadd.f32 %v986, %v924
        %v988 = vadd.f32 %v987, %v925
        %v989 = vadd.f32 %v988, %v926
        %v990 = vadd.f32 %v989, %v927
        %v991 = vadd.f32 %v990, %v928
        %v992 = vadd.f32 %v991, %v929
        %v993 = vadd.f32 %v992, %v930
        %v994 = vadd.f32 %v993, %v931
        %v995 = vadd.f32 %v994, %v932
        %v996 = vadd.f32 %v995, %v933
        %v997 = vadd.f32 %v996, %v934
        %v998 = vadd.f32 %v997, %v935
        %v999 = vadd.f32 %v998, %v936
        %v1000 = vadd.f32 %v999, %v937
        %v1001 = vadd.f32 %v1000, %v938
        %v1002 = vadd.f32 %v1001, %v939
        %v1003 = vadd.f32 %v1002, %v940
        %v1004 = vadd.f32 %v1003, %v941
        %v1005 = vadd.f32 %v1004, %v942
        %v1006 = vadd.f32 %v1005, %v943
        %v1007 = vadd.f32 %v1006, %v944
        %v1008 = vadd.f32 %v1007, %v945
        %v1009 = vadd.f32 %v1008, %v946
        %v1010 = vadd.f32 %v1009, %v947
        %v1011 = vadd.f32 %v1010, %v948
        %v1012 = vadd.f32 %v1011, %v949
        %v1013 = vadd.f32 %v1012, %v950
        %v1014 = vadd.f32 %v1013, %v951
        %v1015 = vadd.f32 %v1014, %v952
        %v1016 = vadd.f32 %v1015, %v953
        %v1017 = vadd.f32 %v1016, %v954
        %v1018 = vadd.f32 %v1017, %v955
        %v1019 = vadd.f32 %v1018, %v956
        %v1020 = vadd.f32 %v1019, %v957
        %v1021 = vadd.f32 %v1020, %v958
        %v1022 = vadd.f32 %v1021, %v959
        %v1023 = vadd.f32 %v1022, %v960
        %v1024 = vadd.f32 %v1023, %v961
        %v1025 = vadd.f32 %v1024, %v962
        %v1026 = vadd.f32 %v1025, %v963
        %v1027 = vadd.f32 %v1026, %v964
        %v1028 = vadd.f32 %v1027, %v965
        %v1029 = vadd.f32 %v1028, %v966
        %v1030 = vadd.f32 %v1029, %v967
        %v1031 = vadd.f32 %v1030, %v968
        %v1032 = vadd.f32 %v1031, %v969
        %v1033 = vadd.f32 %v1032, %v970
        %v1034 = vrot.slane %v1033, 4
        %v1035 = vadd.f32 %v1033, %v1034
        %v1036 = vrot.slane %v1035, 2
        %v1037 = vadd.f32 %v1035, %v1036
        %v1038 = vrot.slane %v1037, 1
        %v1039 = vadd.f32 %v1037, %v1038
        %vm1040 = vcmask 1040384
        %v1041 = vsel %vm1040, %v906, %v1039
        %1042 = vst [vmem:[%s218] sm:$0x3] %v1041
        %s1043 = sand.u32 %s80, 1
        %s1044 = scalar_lea.sflag [#allocation4], %s1043
        %s1045 = sand.u32 %s80, 1
        %s1046 = smul.addr %s1045, 512
        %s1047 = scalar_lea.vmem [#allocation7], %s1046
        %s1048 = sand.u32 %s106, 1
        %s1049 = scalar_lea.sflag [#allocation9], %s1048
        %s1050 = sand.u32 %s106, 1
        %s1051 = smul.addr %s1050, 2
        %s1052 = scalar_lea.vmem [#allocation8], %s1051
        // Predicated region
        $region37: #{tpu_custom_call.1} parent=27 // pred_check
          %p1053 = pneg %p90
        $region38: #{tpu_custom_call.1} parent=27 // pred_check_branch
          %1055 = sbr.rel (%p1053) target = $region40
        $region39: #{tpu_custom_call.1} parent=27 // pred_region
          %s1056 = smul.u32 64, %s25
          %1058 = vsyncadd %s1044, 0
          %s1059 = smul.addr %s1056, 8
          %s1060 = scalar_lea.hbm %s2, %s1059
          %s1061 = sshll.u32 %s1047, 4
          %s1062 = int_to_ptr.vmem [resolvable:$true] %s1061
          %s1063 = sshll.u32 %s1060, 4
          %s1064 = int_to_ptr.hbm [resolvable:$true] %s1063
          %1069 = dma.vmem_to_hbm [thread:$0]  %s1062, 8192, %s1064, %s1044, 128, 128, 8
        $region40: #{tpu_custom_call.1} parent=27 // pred_fallthru
          _
        // Predicated region
        $region41: #{tpu_custom_call.1} parent=27 // pred_check
          %p1070 = pneg %p116
        $region42: #{tpu_custom_call.1} parent=27 // pred_check_branch
          %1072 = sbr.rel (%p1070) target = $region44
        $region43: #{tpu_custom_call.1} parent=27 // pred_region
          %1074 = vsyncadd %s1049, 0
          %s1075 = smul.addr %s25, 2
          %s1076 = scalar_lea.hbm %s3, %s1075
          %s1078 = sshll.u32 %s1052, 4
          %s1079 = int_to_ptr.vmem [resolvable:$true] %s1078
          %s1080 = sshll.u32 %s1076, 4
          %s1081 = int_to_ptr.hbm [resolvable:$true] %s1080
          %1083 = dma.vmem_to_hbm [thread:$0]  %s1079, 32, %s1081, %s1049
        $region44: #{tpu_custom_call.1} parent=27 // pred_fallthru
          _
      $region28: #{tpu_custom_call.1} parent=5 // pred_fallthru
        _
      %p1084 = scmp.le.s32.totalorder 2, %s20
      // Predicated region
      $region45: #{tpu_custom_call.1} parent=5 // pred_check
        %p1085 = pneg %p1084
      $region46: #{tpu_custom_call.1} parent=5 // pred_check_branch
        %1087 = sbr.rel (%p1085) target = $region48
      $region47: #{tpu_custom_call.1} parent=5 // pred_region
        %s1088 = ssub.s32 %s20, 2
        // Predicated region
        $region49: #{tpu_custom_call.1} parent=47 // pred_check
          %p1089 = pneg %p96
        $region50: #{tpu_custom_call.1} parent=47 // pred_check_branch
          %1091 = sbr.rel (%p1089) target = $region52
        $region51: #{tpu_custom_call.1} parent=47 // pred_region
          %s1092 = sand.u32 %s81, 1
          %s1093 = scalar_lea.sflag [#allocation4], %s1092
          %s1094 = sand.u32 %s81, 1
          %s1095 = smul.addr %s1094, 512
          %s1096 = scalar_lea.vmem [#allocation7], %s1095
          %1098 = dma.done %s1093, 8192
        $region52: #{tpu_custom_call.1} parent=47 // pred_fallthru
          _
        // Predicated region
        $region53: #{tpu_custom_call.1} parent=47 // pred_check
          %p1099 = pneg %p122
        $region54: #{tpu_custom_call.1} parent=47 // pred_check_branch
          %1101 = sbr.rel (%p1099) target = $region56
        $region55: #{tpu_custom_call.1} parent=47 // pred_region
          %s1102 = sand.u32 %s107, 1
          %s1103 = scalar_lea.sflag [#allocation9], %s1102
          %s1104 = sand.u32 %s107, 1
          %s1105 = smul.addr %s1104, 2
          %s1106 = scalar_lea.vmem [#allocation8], %s1105
          %1108 = dma.done %s1103, 32
        $region56: #{tpu_custom_call.1} parent=47 // pred_fallthru
          _
      $region48: #{tpu_custom_call.1} parent=5 // pred_fallthru
        _
    $region6: #{tpu_custom_call.1} parent=1 // loop_footer
      %s24 = sadd.s32 1, %s20
    $region7: #{tpu_custom_call.1} parent=1 // loop_footer_branch
      %19 = sbr.rel target = $region3
    $region8: #{tpu_custom_call.1} parent=1 // loop_exit
      _
    %1109 = vsyncpa [#allocation3], 1
    %s1110 = scalar_lea.sflag [#allocation3], 1
    %1111 = vsyncpa %s1110, 1
    %1112 = vsyncpa [#allocation6], 1
    %1113 = vsyncpa [#allocation4], 1
    %s1114 = scalar_lea.sflag [#allocation4], 1
    %1115 = vsyncpa %s1114, 1
    %1116 = vsyncpa [#allocation9], 1
    %s1117 = scalar_lea.sflag [#allocation9], 1
    %1118 = vsyncpa %s1117, 1

</llo_original>
